<compile_context>
chip_gen: v7x
topology: tpu7x:2x2x1
jax: 0.10.0
libtpu: 0.0.40
codegen_flags: <defaults>
</compile_context>

<pallas_src>
import functools

import jax
import jax.numpy as jnp
from jax.experimental import pallas as pl
from jax.experimental.pallas import tpu as pltpu


def _round_up(x, m):
    return ((x + m - 1) // m) * m


def fused_multihead_kernel(fc_ref, mg_ref, w1_ref, w2_ref, b12_ref,
                           w3t_ref, b3_ref, out_ref):
    """One batch tile of: out^T = (relu([fc|mg] @ blkdiag(w1,w2) + b12) @ w3)^T + b3."""
    w1 = w1_ref[...]
    w2 = w2_ref[...]
    w3t = w3t_ref[...]
    wdt = w1.dtype

    # Fused encoders + concat: w1 occupies hidden columns [:H] (zeros elsewhere),
    # w2 occupies [H:2H], so a single add realizes torch.cat(..., dim=1).
    h = jnp.dot(fc_ref[...].astype(wdt), w1, preferred_element_type=jnp.float32)
    h = h + jnp.dot(mg_ref[...].astype(wdt), w2, preferred_element_type=jnp.float32)
    h = jnp.maximum(h + b12_ref[...], 0.0)        # bias + ReLU in f32 (works on v5e VPU)

    # Head emitted transposed: out_t[o, b] = sum_k w3t[o, k] * h[b, k].
    # Output lane dim = batch (dense multiple of 128) -> unmasked stores,
    # compact HBM writes; the rhs transpose rides the XLU (slack on all gens).
    out_t = jax.lax.dot_general(
        w3t, h.astype(wdt),
        dimension_numbers=(((1,), (1,)), ((), ())),
        preferred_element_type=jnp.float32)
    out_ref[...] = (out_t + b3_ref[...]).astype(out_ref.dtype)


def pack_params(params, compute_dtype=None):
    """One-time weight packing (hoisted out of the per-call path).

    compute_dtype is the resident-weight / MXU dtype.  Default: bf16 on v5e
    (lowest HBM BW, full-rate bf16 MXU), f32 elsewhere.  Bias/ReLU/accumulation
    are always f32.  Note: weights are VMEM-resident, so their dtype barely
    affects HBM traffic -- stream bf16 *inputs* if you want fewer bytes.
    """
    if compute_dtype is None:
        kind = jax.devices()[0].device_kind.lower()
        is_v5e = ("v5 lite" in kind) or ("v5e" in kind) or ("v5lite" in kind)
        compute_dtype = jnp.bfloat16 if is_v5e else jnp.float32

    w1, b1, w2, b2, w3, b3 = (params["w1"], params["b1"], params["w2"],
                              params["b2"], params["w3"], params["b3"])
    d_fc, hidden = w1.shape
    d_mg = w2.shape[0]
    d_out = w3.shape[1]
    h2 = 2 * hidden
    h2_p = _round_up(h2, 128)          # hidden slab lane-padded once (weights only)

    w1p = jnp.zeros((d_fc, h2_p), compute_dtype).at[:, :hidden].set(
        w1.astype(compute_dtype))
    w2p = jnp.zeros((d_mg, h2_p), compute_dtype).at[:, hidden:h2].set(
        w2.astype(compute_dtype))
    b12 = jnp.zeros((1, h2_p), jnp.float32).at[:, :h2].set(
        jnp.concatenate([b1.reshape(1, -1), b2.reshape(1, -1)], axis=1)
        .astype(jnp.float32))
    # Head weight pre-transposed so the kernel's transposed dot needs no lhs swap.
    w3t = jnp.zeros((d_out, h2_p), compute_dtype).at[:, :h2].set(
        w3.T.astype(compute_dtype))
    b3c = b3.reshape(d_out, 1).astype(jnp.float32)
    return {"w1p": w1p, "w2p": w2p, "b12": b12, "w3t": w3t, "b3c": b3c}


@functools.partial(jax.jit, static_argnames=("batch_tile",))
def multihead2singleout(fc_in, mg_in, packed, *, batch_tile=2048):
    """Fused forward of MultiHead2SingleOUT.  fc_in:[B,Dfc], mg_in:[B,Dmg] -> [B,Dout]."""
    w1p, w2p, b12, w3t, b3c = (packed["w1p"], packed["w2p"], packed["b12"],
                               packed["w3t"], packed["b3c"])
    B, d_fc = fc_in.shape
    d_mg = mg_in.shape[1]
    h2_p = w1p.shape[1]
    d_out = w3t.shape[0]

    # --- batch tiling ------------------------------------------------------
    # Transposed output puts batch on lanes -> tb must be a multiple of 128.
    b128 = _round_up(B, 128)
    tb = min(_round_up(batch_tile, 128), b128)
    tb = min(tb, 8192)                       # keep VMEM well under v7x's 64 MiB
    if tb >= b128 and b128 >= 256:
        tb = _round_up(b128 // 2, 128)       # grid >= 2: keep both v7x TCs busy
    b_pad = _round_up(B, tb)
    grid = (b_pad // tb,)

    # Pad only the batch dim (no concat / lane padding of X).  Padded rows give
    # garbage in out_t[:, B:] which is sliced off below.
    fc_p = jnp.pad(fc_in, ((0, b_pad - B), (0, 0)))
    mg_p = jnp.pad(mg_in, ((0, b_pad - B), (0, 0)))

    # --- VMEM budget (double-buffered streams + weights + f32 intermediate) --
    in_sz = jnp.dtype(fc_in.dtype).itemsize
    w_sz = jnp.dtype(w1p.dtype).itemsize
    stream_bytes = 2 * tb * (d_fc + d_mg) * in_sz + 2 * d_out * tb * 4
    weight_bytes = 2 * ((d_fc + d_mg + d_out) * h2_p * w_sz + h2_p * 4 + d_out * 4)
    h_bytes = tb * h2_p * 4 + (tb * h2_p * w_sz if w_sz < 4 else 0)
    vmem_limit = int(min(max(stream_bytes + weight_bytes + h_bytes + (1 << 20),
                             4 << 20), 48 << 20))

    # --- cost hint: true streamed bytes (unpadded X, compact output) --------
    flops = 2 * b_pad * h2_p * (d_fc + d_mg + d_out)
    bytes_accessed = int(b_pad * (d_fc + d_mg) * in_sz
                         + (d_fc + d_mg + d_out) * h2_p * w_sz
                         + (h2_p + d_out) * 4
                         + b_pad * d_out * 4)

    out_t = pl.pallas_call(
        fused_multihead_kernel,
        out_shape=jax.ShapeDtypeStruct((d_out, b_pad), jnp.float32),
        grid=grid,
        in_specs=[
            pl.BlockSpec((tb, d_fc), lambda i: (i, 0)),      # streamed fc tile
            pl.BlockSpec((tb, d_mg), lambda i: (i, 0)),      # streamed mg tile
            pl.BlockSpec((d_fc, h2_p), lambda i: (0, 0)),    # resident enc-fc weight
            pl.BlockSpec((d_mg, h2_p), lambda i: (0, 0)),    # resident enc-mg weight
            pl.BlockSpec((1, h2_p), lambda i: (0, 0)),       # resident concat bias (f32)
            pl.BlockSpec((d_out, h2_p), lambda i: (0, 0)),   # resident head weight^T
            pl.BlockSpec((d_out, 1), lambda i: (0, 0)),      # resident head bias (f32)
        ],
        out_specs=pl.BlockSpec((d_out, tb), lambda i: (0, i)),  # lane-dense transposed out
        compiler_params=pltpu.CompilerParams(
            dimension_semantics=("parallel",),               # megacore split on v7x
            vmem_limit_bytes=vmem_limit,
        ),
        cost_estimate=pl.CostEstimate(
            flops=flops, transcendentals=0, bytes_accessed=bytes_accessed),
    )(fc_p, mg_p, w1p, w2p, b12, w3t, b3c)

    # Tiny (d_out, B) -> (B, d_out) transpose; fuses under jit.
    return out_t[:, :B].T


def reference_forward(fc_in, mg_in, params):
    """Plain-JAX reference mirroring the PyTorch forward."""
    out1 = jnp.maximum(fc_in @ params["w1"] + params["b1"], 0.0)
    out2 = jnp.maximum(mg_in @ params["w2"] + params["b2"], 0.0)
    hidden = jnp.concatenate([out1, out2], axis=1)   # torch.cat(..., dim=1)
    return hidden @ params["w3"] + params["b3"]


def init_params(key, d_fc, d_mg, hidden, d_out):
    ks = jax.random.split(key, 6)
    scale = 0.1
    return {
        "w1": scale * jax.random.normal(ks[0], (d_fc, hidden), jnp.float32),
        "b1": scale * jax.random.normal(ks[1], (1, hidden), jnp.float32),
        "w2": scale * jax.random.normal(ks[2], (d_mg, hidden), jnp.float32),
        "b2": scale * jax.random.normal(ks[3], (1, hidden), jnp.float32),
        "w3": scale * jax.random.normal(ks[4], (2 * hidden, d_out), jnp.float32),
        "b3": scale * jax.random.normal(ks[5], (1, d_out), jnp.float32),
    }


if __name__ == "__main__":
    key = jax.random.PRNGKey(0)
    k_fc, k_mg, k_params = jax.random.split(key, 3)

    # Small but multi-tile: B=300 with batch_tile=128 -> grid=(3,), and the
    # default tiling path -> grid=(2,) (both v7x cores exercised).
    B, D_FC, D_MG, HIDDEN, D_OUT = 300, 16, 24, 32, 4

    fc_in = jax.random.normal(k_fc, (B, D_FC), jnp.float32)
    mg_in = jax.random.normal(k_mg, (B, D_MG), jnp.float32)
    params = init_params(k_params, D_FC, D_MG, HIDDEN, D_OUT)

    ref = reference_forward(fc_in, mg_in, params)

    # f32 resident weights, multi-tile grid.
    packed_f32 = pack_params(params, compute_dtype=jnp.float32)
    out_f32 = jax.block_until_ready(
        multihead2singleout(fc_in, mg_in, packed_f32, batch_tile=128))
    assert out_f32.shape == (B, D_OUT)
    assert jnp.allclose(out_f32, ref, atol=1e-4, rtol=1e-4), "f32 mismatch vs reference"

    # Default tiling path (tb chosen so grid >= 2 when B allows).
    out_def = jax.block_until_ready(multihead2singleout(fc_in, mg_in, packed_f32))
    assert out_def.shape == (B, D_OUT)
    assert jnp.allclose(out_def, ref, atol=1e-4, rtol=1e-4), "default-tile mismatch vs reference"

    # bf16 resident weights (f32 bias/ReLU/accumulation): looser tolerance.
    packed_bf16 = pack_params(params, compute_dtype=jnp.bfloat16)
    out_bf16 = jax.block_until_ready(
        multihead2singleout(fc_in, mg_in, packed_bf16, batch_tile=128))
    assert out_bf16.shape == (B, D_OUT)
    assert jnp.allclose(out_bf16, ref, atol=5e-2, rtol=5e-2), "bf16 mismatch vs reference"

    print("KERNEL_OK")
</pallas_src>

<mosaic_0001>
module attributes {stable_mosaic.version = 11 : i64} {
  func.func @fused_multihead_kernel(%arg0: i32, %arg1: memref<128x16xf32, #tpu.memory_space<vmem>>, %arg2: memref<128x24xf32, #tpu.memory_space<vmem>>, %arg3: memref<16x128xf32, #tpu.memory_space<vmem>>, %arg4: memref<24x128xf32, #tpu.memory_space<vmem>>, %arg5: memref<1x128xf32, #tpu.memory_space<vmem>>, %arg6: memref<4x128xf32, #tpu.memory_space<vmem>>, %arg7: memref<4x1xf32, #tpu.memory_space<vmem>>, %arg8: memref<4x128xf32, #tpu.memory_space<vmem>>) attributes {dimension_semantics = [#tpu.dimension_semantics<parallel>], iteration_bounds = array<i64: 3>, scalar_prefetch = 0 : i64, scratch_operands = 0 : i64, tpu.core_type = #tpu.core_type<tc>, window_params = [{transform_indices = @transform_0, window_bounds = array<i64: 128, 16>}, {transform_indices = @transform_1, window_bounds = array<i64: 128, 24>}, {pipeline_mode = #tpu.pipeline_mode<synchronous>, transform_indices = @transform_2, window_bounds = array<i64: 16, 128>}, {pipeline_mode = #tpu.pipeline_mode<synchronous>, transform_indices = @transform_3, window_bounds = array<i64: 24, 128>}, {pipeline_mode = #tpu.pipeline_mode<synchronous>, transform_indices = @transform_4, window_bounds = array<i64: 1, 128>}, {pipeline_mode = #tpu.pipeline_mode<synchronous>, transform_indices = @transform_5, window_bounds = array<i64: 4, 128>}, {pipeline_mode = #tpu.pipeline_mode<synchronous>, transform_indices = @transform_6, window_bounds = array<i64: 4, 1>}, {transform_indices = @transform_7, window_bounds = array<i64: 4, 128>}]} {
    %c0 = arith.constant 0 : index
    %c0_0 = arith.constant 0 : index
    %0 = vector.load %arg3[%c0, %c0_0] : memref<16x128xf32, #tpu.memory_space<vmem>>, vector<16x128xf32>
    %c0_1 = arith.constant 0 : index
    %c0_2 = arith.constant 0 : index
    %1 = vector.load %arg4[%c0_1, %c0_2] : memref<24x128xf32, #tpu.memory_space<vmem>>, vector<24x128xf32>
    %c0_3 = arith.constant 0 : index
    %c0_4 = arith.constant 0 : index
    %2 = vector.load %arg6[%c0_3, %c0_4] : memref<4x128xf32, #tpu.memory_space<vmem>>, vector<4x128xf32>
    %c0_5 = arith.constant 0 : index
    %c0_6 = arith.constant 0 : index
    %3 = vector.load %arg1[%c0_5, %c0_6] : memref<128x16xf32, #tpu.memory_space<vmem>>, vector<128x16xf32>
    %cst = arith.constant dense<0.000000e+00> : vector<128x128xf32>
    %4 = tpu.matmul %3, %0, %cst {dimension_numbers = #tpu.dot_dimension_numbers<[1], [0], [0], [1], [0, 0, 1, 1], [], []>} : vector<128x16xf32>, vector<16x128xf32>, vector<128x128xf32> -> vector<128x128xf32>
    %c0_7 = arith.constant 0 : index
    %c0_8 = arith.constant 0 : index
    %5 = vector.load %arg2[%c0_7, %c0_8] : memref<128x24xf32, #tpu.memory_space<vmem>>, vector<128x24xf32>
    %cst_9 = arith.constant dense<0.000000e+00> : vector<128x128xf32>
    %6 = tpu.matmul %5, %1, %cst_9 {dimension_numbers = #tpu.dot_dimension_numbers<[1], [0], [0], [1], [0, 0, 1, 1], [], []>} : vector<128x24xf32>, vector<24x128xf32>, vector<128x128xf32> -> vector<128x128xf32>
    %7 = arith.addf %4, %6 : vector<128x128xf32>
    %c0_10 = arith.constant 0 : index
    %c0_11 = arith.constant 0 : index
    %8 = vector.load %arg5[%c0_10, %c0_11] : memref<1x128xf32, #tpu.memory_space<vmem>>, vector<1x128xf32>
    %9 = vector.broadcast %8 : vector<1x128xf32> to vector<128x128xf32>
    %10 = arith.addf %7, %9 : vector<128x128xf32>
    %cst_12 = arith.constant 0.000000e+00 : f32
    %11 = vector.broadcast %cst_12 : f32 to vector<128x128xf32>
    %12 = arith.maximumf %10, %11 : vector<128x128xf32>
    %cst_13 = arith.constant dense<0.000000e+00> : vector<4x128xf32>
    %13 = tpu.matmul %2, %12, %cst_13 {dimension_numbers = #tpu.dot_dimension_numbers<[1], [1], [0], [0], [0, 0, 1, 0], [], []>} : vector<4x128xf32>, vector<128x128xf32>, vector<4x128xf32> -> vector<4x128xf32>
    %c0_14 = arith.constant 0 : index
    %c0_15 = arith.constant 0 : index
    %14 = vector.load %arg7[%c0_14, %c0_15] : memref<4x1xf32, #tpu.memory_space<vmem>>, vector<4x1xf32>
    %15 = vector.broadcast %14 : vector<4x1xf32> to vector<4x128xf32>
    %16 = arith.addf %13, %15 : vector<4x128xf32>
    %c0_16 = arith.constant 0 : index
    %c0_17 = arith.constant 0 : index
    %17 = vector.load %arg8[%c0_16, %c0_17] : memref<4x128xf32, #tpu.memory_space<vmem>>, vector<4x128xf32>
    tpu.vector_store %arg8[%c0_16, %c0_17], %16 {strides = array<i32>} : memref<4x128xf32, #tpu.memory_space<vmem>>, vector<4x128xf32>,
    return
  }
  func.func @transform_0(%arg0: i32) -> (i32, i32) {
    %c0_i32 = arith.constant 0 : i32
    %c0_i32_0 = arith.constant 0 : i32
    return %arg0, %c0_i32 : i32, i32
  }
  func.func @transform_1(%arg0: i32) -> (i32, i32) {
    %c0_i32 = arith.constant 0 : i32
    %c0_i32_0 = arith.constant 0 : i32
    return %arg0, %c0_i32 : i32, i32
  }
  func.func @transform_2(%arg0: i32) -> (i32, i32) {
    %c0_i32 = arith.constant 0 : i32
    %c0_i32_0 = arith.constant 0 : i32
    %c0_i32_1 = arith.constant 0 : i32
    return %c0_i32, %c0_i32_0 : i32, i32
  }
  func.func @transform_3(%arg0: i32) -> (i32, i32) {
    %c0_i32 = arith.constant 0 : i32
    %c0_i32_0 = arith.constant 0 : i32
    %c0_i32_1 = arith.constant 0 : i32
    return %c0_i32, %c0_i32_0 : i32, i32
  }
  func.func @transform_4(%arg0: i32) -> (i32, i32) {
    %c0_i32 = arith.constant 0 : i32
    %c0_i32_0 = arith.constant 0 : i32
    %c0_i32_1 = arith.constant 0 : i32
    return %c0_i32, %c0_i32_0 : i32, i32
  }
  func.func @transform_5(%arg0: i32) -> (i32, i32) {
    %c0_i32 = arith.constant 0 : i32
    %c0_i32_0 = arith.constant 0 : i32
    %c0_i32_1 = arith.constant 0 : i32
    return %c0_i32, %c0_i32_0 : i32, i32
  }
  func.func @transform_6(%arg0: i32) -> (i32, i32) {
    %c0_i32 = arith.constant 0 : i32
    %c0_i32_0 = arith.constant 0 : i32
    %c0_i32_1 = arith.constant 0 : i32
    return %c0_i32, %c0_i32_0 : i32, i32
  }
  func.func @transform_7(%arg0: i32) -> (i32, i32) {
    %c0_i32 = arith.constant 0 : i32
    %c0_i32_0 = arith.constant 0 : i32
    return %c0_i32, %arg0 : i32, i32
  }
}

</mosaic_0001>

<llo_original>
// kernel: multihead2singleout.1
$region0: #{multihead2singleout.1}
  #allocation0 [shape = 'u32[]', space=smem, size = 0x4, offset = 0x4, fixed_abs, tag = 'smem constant byte address 0x4 - core index']
  #allocation1 [shape = 'u32[144,128]{1,0:T(1,128)}', space=vmem, size = 0x12000, scoped, tag = 'internal scratch']
  %s0 = inlined_call_operand.vmem [shape: f32[384,16], index: 0, kind: input, shape index: {}]
  %s1 = inlined_call_operand.vmem [shape: f32[384,24], index: 1, kind: input, shape index: {}]
  %s2 = inlined_call_operand.vmem [shape: f32[16,128], index: 2, kind: input, shape index: {}]
  %s3 = inlined_call_operand.vmem [shape: f32[24,128], index: 3, kind: input, shape index: {}]
  %s4 = inlined_call_operand.vmem [shape: f32[1,128], index: 4, kind: input, shape index: {}]
  %s5 = inlined_call_operand.vmem [shape: f32[4,128], index: 5, kind: input, shape index: {}]
  %s6 = inlined_call_operand.vmem [shape: f32[4,1], index: 6, kind: input, shape index: {}]
  %s7 = inlined_call_operand.vmem [shape: f32[4,384], index: 7, kind: output, shape index: {}]
  %s8 = sld [smem:[#allocation0]]
  $region61: #{multihead2singleout.1} parent=0
    _
  %s10 = ssub.s32 1, %s8
  %s11 = scalar_select 0, %s10, %s8
  loop: start=0, step=1, limit=5
  $region2: #{multihead2singleout.1} parent=0 // loop_pre_header
    _
  $region3: #{multihead2singleout.1} parent=0 // loop_header
    %s13 = sphi 0, %s17
    %p14 = scmp.ge.s32.totalorder %s13, 5
    %s23 = sphi 0, %s25
    %s26 = sphi 0, %s23
    %s27 = sphi 0, %s26
    %s43 = sphi 0, %s27
    %s49 = sphi 0, %s51
    %s52 = sphi 0, %s49
    %s53 = sphi 0, %s52
    %s69 = sphi 0, %s53
    %s73 = sphi 0, %s73
    %s75 = sphi 0, %s73
    %s76 = sphi 0, %s75
    %s90 = sphi 0, %s76
    %s94 = sphi 0, %s94
    %s96 = sphi 0, %s94
    %s97 = sphi 0, %s96
    %s111 = sphi 0, %s97
    %s115 = sphi 0, %s115
    %s117 = sphi 0, %s115
    %s118 = sphi 0, %s117
    %s132 = sphi 0, %s118
    %s136 = sphi 0, %s136
    %s138 = sphi 0, %s136
    %s139 = sphi 0, %s138
    %s153 = sphi 0, %s139
    %s157 = sphi 0, %s157
    %s159 = sphi 0, %s157
    %s160 = sphi 0, %s159
    %s174 = sphi 0, %s160
    %s180 = sphi 0, %s182
    %s183 = sphi 0, %s180
    %s184 = sphi 0, %s183
    %s200 = sphi 0, %s184
  $region4: #{multihead2singleout.1} parent=0 // loop_header_branch
    %16 = sbr.rel (%p14) target = $region8
  $region5: #{multihead2singleout.1} parent=0 // loop_body
    %s18 = ssub.s32 %s13, 1
    %s19 = ssub.s32 %s13, 2
    %s20 = sadd.s32 %s13, 1
    %s21 = ssub.s32 %s13, %s20
    %p22 = scmp.eq.s32.totalorder %s21, 0
    %s24 = sadd.s32 %s23, 1
    %s25 = scalar_select %p22, %s23, %s24
    %p28 = pneg %p22
    %p29 = scmp.eq.s32.totalorder %s13, 2
    %p30 = por %p28, %p29
    %p31 = scmp.ne.s32.totalorder %s23, %s26
    %p32 = scmp.eq.s32.totalorder %s13, 0
    %p33 = por %p31, %p32
    %p34 = scmp.ne.s32.totalorder %s23, %s26
    %p35 = scmp.eq.s32.totalorder %s18, 2
    %p36 = por %p34, %p35
    %p37 = scmp.ne.s32.totalorder %s26, %s27
    %p38 = scmp.eq.s32.totalorder %s18, 0
    %p39 = por %p37, %p38
    %p40 = scmp.ne.s32.totalorder %s26, %s27
    %p41 = scmp.eq.s32.totalorder %s19, 2
    %p42 = por %p40, %p41
    %p44 = scmp.ne.s32.totalorder %s27, %s43
    %p45 = scmp.eq.s32.totalorder %s19, 0
    %p46 = por %p44, %p45
    %s47 = ssub.s32 %s13, %s20
    %p48 = scmp.eq.s32.totalorder %s47, 0
    %s50 = sadd.s32 %s49, 1
    %s51 = scalar_select %p48, %s49, %s50
    %p54 = pneg %p48
    %p55 = scmp.eq.s32.totalorder %s13, 2
    %p56 = por %p54, %p55
    %p57 = scmp.ne.s32.totalorder %s49, %s52
    %p58 = scmp.eq.s32.totalorder %s13, 0
    %p59 = por %p57, %p58
    %p60 = scmp.ne.s32.totalorder %s49, %s52
    %p61 = scmp.eq.s32.totalorder %s18, 2
    %p62 = por %p60, %p61
    %p63 = scmp.ne.s32.totalorder %s52, %s53
    %p64 = scmp.eq.s32.totalorder %s18, 0
    %p65 = por %p63, %p64
    %p66 = scmp.ne.s32.totalorder %s52, %s53
    %p67 = scmp.eq.s32.totalorder %s19, 2
    %p68 = por %p66, %p67
    %p70 = scmp.ne.s32.totalorder %s53, %s69
    %p71 = scmp.eq.s32.totalorder %s19, 0
    %p72 = por %p70, %p71
    %s74 = sadd.s32 %s73, 1
    %p77 = scmp.eq.s32.totalorder %s13, 2
    %p78 = scmp.ne.s32.totalorder %s73, %s75
    %p79 = scmp.eq.s32.totalorder %s13, 0
    %p80 = por %p78, %p79
    %p81 = scmp.ne.s32.totalorder %s73, %s75
    %p82 = scmp.eq.s32.totalorder %s18, 2
    %p83 = por %p81, %p82
    %p84 = scmp.ne.s32.totalorder %s75, %s76
    %p85 = scmp.eq.s32.totalorder %s18, 0
    %p86 = por %p84, %p85
    %p87 = scmp.ne.s32.totalorder %s75, %s76
    %p88 = scmp.eq.s32.totalorder %s19, 2
    %p89 = por %p87, %p88
    %p91 = scmp.ne.s32.totalorder %s76, %s90
    %p92 = scmp.eq.s32.totalorder %s19, 0
    %p93 = por %p91, %p92
    %s95 = sadd.s32 %s94, 1
    %p98 = scmp.eq.s32.totalorder %s13, 2
    %p99 = scmp.ne.s32.totalorder %s94, %s96
    %p100 = scmp.eq.s32.totalorder %s13, 0
    %p101 = por %p99, %p100
    %p102 = scmp.ne.s32.totalorder %s94, %s96
    %p103 = scmp.eq.s32.totalorder %s18, 2
    %p104 = por %p102, %p103
    %p105 = scmp.ne.s32.totalorder %s96, %s97
    %p106 = scmp.eq.s32.totalorder %s18, 0
    %p107 = por %p105, %p106
    %p108 = scmp.ne.s32.totalorder %s96, %s97
    %p109 = scmp.eq.s32.totalorder %s19, 2
    %p110 = por %p108, %p109
    %p112 = scmp.ne.s32.totalorder %s97, %s111
    %p113 = scmp.eq.s32.totalorder %s19, 0
    %p114 = por %p112, %p113
    %s116 = sadd.s32 %s115, 1
    %p119 = scmp.eq.s32.totalorder %s13, 2
    %p120 = scmp.ne.s32.totalorder %s115, %s117
    %p121 = scmp.eq.s32.totalorder %s13, 0
    %p122 = por %p120, %p121
    %p123 = scmp.ne.s32.totalorder %s115, %s117
    %p124 = scmp.eq.s32.totalorder %s18, 2
    %p125 = por %p123, %p124
    %p126 = scmp.ne.s32.totalorder %s117, %s118
    %p127 = scmp.eq.s32.totalorder %s18, 0
    %p128 = por %p126, %p127
    %p129 = scmp.ne.s32.totalorder %s117, %s118
    %p130 = scmp.eq.s32.totalorder %s19, 2
    %p131 = por %p129, %p130
    %p133 = scmp.ne.s32.totalorder %s118, %s132
    %p134 = scmp.eq.s32.totalorder %s19, 0
    %p135 = por %p133, %p134
    %s137 = sadd.s32 %s136, 1
    %p140 = scmp.eq.s32.totalorder %s13, 2
    %p141 = scmp.ne.s32.totalorder %s136, %s138
    %p142 = scmp.eq.s32.totalorder %s13, 0
    %p143 = por %p141, %p142
    %p144 = scmp.ne.s32.totalorder %s136, %s138
    %p145 = scmp.eq.s32.totalorder %s18, 2
    %p146 = por %p144, %p145
    %p147 = scmp.ne.s32.totalorder %s138, %s139
    %p148 = scmp.eq.s32.totalorder %s18, 0
    %p149 = por %p147, %p148
    %p150 = scmp.ne.s32.totalorder %s138, %s139
    %p151 = scmp.eq.s32.totalorder %s19, 2
    %p152 = por %p150, %p151
    %p154 = scmp.ne.s32.totalorder %s139, %s153
    %p155 = scmp.eq.s32.totalorder %s19, 0
    %p156 = por %p154, %p155
    %s158 = sadd.s32 %s157, 1
    %p161 = scmp.eq.s32.totalorder %s13, 2
    %p162 = scmp.ne.s32.totalorder %s157, %s159
    %p163 = scmp.eq.s32.totalorder %s13, 0
    %p164 = por %p162, %p163
    %p165 = scmp.ne.s32.totalorder %s157, %s159
    %p166 = scmp.eq.s32.totalorder %s18, 2
    %p167 = por %p165, %p166
    %p168 = scmp.ne.s32.totalorder %s159, %s160
    %p169 = scmp.eq.s32.totalorder %s18, 0
    %p170 = por %p168, %p169
    %p171 = scmp.ne.s32.totalorder %s159, %s160
    %p172 = scmp.eq.s32.totalorder %s19, 2
    %p173 = por %p171, %p172
    %p175 = scmp.ne.s32.totalorder %s160, %s174
    %p176 = scmp.eq.s32.totalorder %s19, 0
    %p177 = por %p175, %p176
    %s178 = ssub.s32 %s13, %s20
    %p179 = scmp.eq.s32.totalorder %s178, 0
    %s181 = sadd.s32 %s180, 1
    %s182 = scalar_select %p179, %s180, %s181
    %p185 = pneg %p179
    %p186 = scmp.eq.s32.totalorder %s13, 2
    %p187 = por %p185, %p186
    %p188 = scmp.ne.s32.totalorder %s180, %s183
    %p189 = scmp.eq.s32.totalorder %s13, 0
    %p190 = por %p188, %p189
    %p191 = scmp.ne.s32.totalorder %s180, %s183
    %p192 = scmp.eq.s32.totalorder %s18, 2
    %p193 = por %p191, %p192
    %p194 = scmp.ne.s32.totalorder %s183, %s184
    %p195 = scmp.eq.s32.totalorder %s18, 0
    %p196 = por %p194, %p195
    %p197 = scmp.ne.s32.totalorder %s183, %s184
    %p198 = scmp.eq.s32.totalorder %s19, 2
    %p199 = por %p197, %p198
    %p201 = scmp.ne.s32.totalorder %s184, %s200
    %p202 = scmp.eq.s32.totalorder %s19, 0
    %p203 = por %p201, %p202
    %p204 = scmp.le.s32.totalorder 1, %s13
    %p205 = scmp.lt.s32.totalorder %s13, 4
    %p206 = pnand %p204, %p205
    %p207 = pneg %p206
    // Predicated region
    $region9: #{multihead2singleout.1} parent=5 // pred_check
      _
    $region10: #{multihead2singleout.1} parent=5 // pred_check_branch
      %209 = sbr.rel (%p206) target = $region12
    $region11: #{multihead2singleout.1} parent=5 // pred_region
      %s210 = ssub.s32 %s13, 1
      // Predicated region
      $region13: #{multihead2singleout.1} parent=11 // pred_check
        %p211 = pneg %p86
      $region14: #{multihead2singleout.1} parent=11 // pred_check_branch
        %213 = sbr.rel (%p211) target = $region16
      $region15: #{multihead2singleout.1} parent=11 // pred_region
        _
      $region16: #{multihead2singleout.1} parent=11 // pred_fallthru
        _
      // Predicated region
      $region17: #{multihead2singleout.1} parent=11 // pred_check
        %p214 = pneg %p107
      $region18: #{multihead2singleout.1} parent=11 // pred_check_branch
        %216 = sbr.rel (%p214) target = $region20
      $region19: #{multihead2singleout.1} parent=11 // pred_region
        _
      $region20: #{multihead2singleout.1} parent=11 // pred_fallthru
        _
      // Predicated region
      $region21: #{multihead2singleout.1} parent=11 // pred_check
        %p217 = pneg %p128
      $region22: #{multihead2singleout.1} parent=11 // pred_check_branch
        %219 = sbr.rel (%p217) target = $region24
      $region23: #{multihead2singleout.1} parent=11 // pred_region
        _
      $region24: #{multihead2singleout.1} parent=11 // pred_fallthru
        _
      // Predicated region
      $region25: #{multihead2singleout.1} parent=11 // pred_check
        %p220 = pneg %p149
      $region26: #{multihead2singleout.1} parent=11 // pred_check_branch
        %222 = sbr.rel (%p220) target = $region28
      $region27: #{multihead2singleout.1} parent=11 // pred_region
        _
      $region28: #{multihead2singleout.1} parent=11 // pred_fallthru
        _
      // Predicated region
      $region29: #{multihead2singleout.1} parent=11 // pred_check
        %p223 = pneg %p170
      $region30: #{multihead2singleout.1} parent=11 // pred_check_branch
        %225 = sbr.rel (%p223) target = $region32
      $region31: #{multihead2singleout.1} parent=11 // pred_region
        _
      $region32: #{multihead2singleout.1} parent=11 // pred_fallthru
        _
    $region12: #{multihead2singleout.1} parent=5 // pred_fallthru
      _
    %p226 = scmp.lt.s32.totalorder %s13, 3
    // Predicated region
    $region33: #{multihead2singleout.1} parent=5 // pred_check
      %p227 = pneg %p226
    $region34: #{multihead2singleout.1} parent=5 // pred_check_branch
      %229 = sbr.rel (%p227) target = $region36
    $region35: #{multihead2singleout.1} parent=5 // pred_region
      // Predicated region
      $region37: #{multihead2singleout.1} parent=35 // pred_check
        %p230 = pneg %p33
      $region38: #{multihead2singleout.1} parent=35 // pred_check_branch
        %232 = sbr.rel (%p230) target = $region40
      $region39: #{multihead2singleout.1} parent=35 // pred_region
        %s233 = smul.u32 16, %s13
        %p234 = scmp.lt.s32.totalorder %s233, 47
        %s235 = scalar_select %p234, %s233, 47
        %s236 = smul.addr %s235, 8
        %s237 = scalar_lea.vmem %s0, %s236
        %s238 = smul.u32 16, %s13
      $region40: #{multihead2singleout.1} parent=35 // pred_fallthru
        _
      // Predicated region
      $region41: #{multihead2singleout.1} parent=35 // pred_check
        %p239 = pneg %p59
      $region42: #{multihead2singleout.1} parent=35 // pred_check_branch
        %241 = sbr.rel (%p239) target = $region44
      $region43: #{multihead2singleout.1} parent=35 // pred_region
        %s242 = smul.u32 16, %s13
        %p243 = scmp.lt.s32.totalorder %s242, 47
        %s244 = scalar_select %p243, %s242, 47
        %s245 = smul.addr %s244, 8
        %s246 = scalar_lea.vmem %s1, %s245
        %s247 = smul.u32 16, %s13
      $region44: #{multihead2singleout.1} parent=35 // pred_fallthru
        _
    $region36: #{multihead2singleout.1} parent=5 // pred_fallthru
      _
    %p248 = scmp.le.s32.totalorder 1, %s13
    %p249 = scmp.lt.s32.totalorder %s13, 4
    %p250 = pnand %p248, %p249
    %p251 = pneg %p250
    // Predicated region
    $region45: #{multihead2singleout.1} parent=5 // pred_check
      _
    $region46: #{multihead2singleout.1} parent=5 // pred_check_branch
      %253 = sbr.rel (%p250) target = $region48
    $region47: #{multihead2singleout.1} parent=5 // pred_region
      %s254 = ssub.s32 %s13, 1
      %s255 = smul.u32 16, %s18
      %p256 = scmp.lt.s32.totalorder %s255, 47
      %s257 = scalar_select %p256, %s255, 47
      %s258 = smul.addr %s257, 8
      %s259 = scalar_lea.vmem %s0, %s258
      %p260 = pneg %p39
      %p261 = pneg %p36
      %s262 = smul.u32 16, %s18
      %p263 = scmp.lt.s32.totalorder %s262, 47
      %s264 = scalar_select %p263, %s262, 47
      %s265 = smul.addr %s264, 8
      %s266 = scalar_lea.vmem %s1, %s265
      %p267 = pneg %p65
      %p268 = pneg %p62
      %p269 = pneg %p86
      %p270 = pneg %p83
      %p271 = pneg %p107
      %p272 = pneg %p104
      %p273 = pneg %p128
      %p274 = pneg %p125
      %p275 = pneg %p149
      %p276 = pneg %p146
      %p277 = pneg %p170
      %p278 = pneg %p167
      %p279 = pneg %p196
      %p280 = pneg %p193
      %p281 = scmp.lt.s32.totalorder %s18, 2
      %s282 = scalar_select %p281, %s18, 2
      %s283 = smul.addr %s282, 4
      %s284 = scalar_lea.vmem %s7, %s283
      %s285 = smul.u32 16, %s18
      %p286 = scmp.lt.s32.totalorder %s285, 47
      %s287 = scalar_select %p286, %s285, 47
      %s288 = smul.addr %s287, 8
      %s289 = scalar_lea.vmem %s0, %s288
      %s290 = smul.u32 16, %s18
      %s291 = smul.u32 16, %s18
      %p292 = scmp.lt.s32.totalorder %s291, 47
      %s293 = scalar_select %p292, %s291, 47
      %s294 = smul.addr %s293, 8
      %s295 = scalar_lea.vmem %s1, %s294
      %s296 = smul.u32 16, %s18
      %p297 = scmp.lt.s32.totalorder %s18, 2
      %s298 = scalar_select %p297, %s18, 2
      %s299 = smul.addr %s298, 4
      %s300 = scalar_lea.vmem %s7, %s299
      %v301 = vld [vmem:[%s2] sm:$0xff]
      %v302 = vld [vmem:[%s2 + $0x8] sm:$0xff]
      %v303 = vld [vmem:[%s3] sm:$0xff]
      %v304 = vld [vmem:[%s3 + $0x8] sm:$0xff]
      %v305 = vld [vmem:[%s3 + $0x10] sm:$0xff]
      %v306 = vld [vmem:[%s5] sm:$0xf]
      %v307 = vld [vmem:[%s289] sm:$0xff]
      %v308 = vld [vmem:[%s289 + $0x8] sm:$0xff]
      %v309 = vld [vmem:[%s289 + $0x10] sm:$0xff]
      %v310 = vld [vmem:[%s289 + $0x18] sm:$0xff]
      %v311 = vld [vmem:[%s289 + $0x20] sm:$0xff]
      %v312 = vld [vmem:[%s289 + $0x28] sm:$0xff]
      %v313 = vld [vmem:[%s289 + $0x30] sm:$0xff]
      %v314 = vld [vmem:[%s289 + $0x38] sm:$0xff]
      %v315 = vld [vmem:[%s289 + $0x40] sm:$0xff]
      %v316 = vld [vmem:[%s289 + $0x48] sm:$0xff]
      %v317 = vld [vmem:[%s289 + $0x50] sm:$0xff]
      %v318 = vld [vmem:[%s289 + $0x58] sm:$0xff]
      %v319 = vld [vmem:[%s289 + $0x60] sm:$0xff]
      %v320 = vld [vmem:[%s289 + $0x68] sm:$0xff]
      %v321 = vld [vmem:[%s289 + $0x70] sm:$0xff]
      %v322 = vld [vmem:[%s289 + $0x78] sm:$0xff]
      %v323 = vld [vmem:[%s295] sm:$0xff]
      %v324 = vld [vmem:[%s295 + $0x8] sm:$0xff]
      %v325 = vld [vmem:[%s295 + $0x10] sm:$0xff]
      %v326 = vld [vmem:[%s295 + $0x18] sm:$0xff]
      %v327 = vld [vmem:[%s295 + $0x20] sm:$0xff]
      %v328 = vld [vmem:[%s295 + $0x28] sm:$0xff]
      %v329 = vld [vmem:[%s295 + $0x30] sm:$0xff]
      %v330 = vld [vmem:[%s295 + $0x38] sm:$0xff]
      %v331 = vld [vmem:[%s295 + $0x40] sm:$0xff]
      %v332 = vld [vmem:[%s295 + $0x48] sm:$0xff]
      %v333 = vld [vmem:[%s295 + $0x50] sm:$0xff]
      %v334 = vld [vmem:[%s295 + $0x58] sm:$0xff]
      %v335 = vld [vmem:[%s295 + $0x60] sm:$0xff]
      %v336 = vld [vmem:[%s295 + $0x68] sm:$0xff]
      %v337 = vld [vmem:[%s295 + $0x70] sm:$0xff]
      %v338 = vld [vmem:[%s295 + $0x78] sm:$0xff]
      %vm339 = vcmask 195584
      %v341 = vsel %vm339, %v323, 0
      %v344 = vsel %vm339, %v324, 0
      %v347 = vsel %vm339, %v325, 0
      %v350 = vsel %vm339, %v326, 0
      %v353 = vsel %vm339, %v327, 0
      %v356 = vsel %vm339, %v328, 0
      %v359 = vsel %vm339, %v329, 0
      %v362 = vsel %vm339, %v330, 0
      %v365 = vsel %vm339, %v331, 0
      %v368 = vsel %vm339, %v332, 0
      %v371 = vsel %vm339, %v333, 0
      %v374 = vsel %vm339, %v334, 0
      %v377 = vsel %vm339, %v335, 0
      %v380 = vsel %vm339, %v336, 0
      %v383 = vsel %vm339, %v337, 0
      %v386 = vsel %vm339, %v338, 0
      %388 = vmatprep.subr.mxu0 0.0
      %389 = vmatpush1.msra.mxu0 %v303
      %390 = vmatprep.subr.mxu0 0.0
      %391 = vmatpush1.msra.mxu0 %v304
      %392 = vmatprep.subr.mxu0 0.0
      %393 = vmatpush1.msra.mxu0 %v305
      %394 = vmatprep.subr.mxu0 0.0
      %395 = vmatpush1.msra.mxu0 0.0
      %396 = vmatprep.subr.mxu0 0.0
      %397 = vmatpush1.msra.mxu0 0.0
      %398 = vmatprep.subr.mxu0 0.0
      %399 = vmatpush1.msra.mxu0 0.0
      %400 = vmatprep.subr.mxu0 0.0
      %401 = vmatpush1.msra.mxu0 0.0
      %402 = vmatprep.subr.mxu0 0.0
      %403 = vmatpush1.msra.mxu0 0.0
      %404 = vmatprep.subr.mxu0 0.0
      %405 = vmatpush1.msra.mxu0 0.0
      %406 = vmatprep.subr.mxu0 0.0
      %407 = vmatpush1.msra.mxu0 0.0
      %408 = vmatprep.subr.mxu0 0.0
      %409 = vmatpush1.msra.mxu0 0.0
      %410 = vmatprep.subr.mxu0 0.0
      %411 = vmatpush1.msra.mxu0 0.0
      %412 = vmatprep.subr.mxu0 0.0
      %413 = vmatpush1.msra.mxu0 0.0
      %414 = vmatprep.subr.mxu0 0.0
      %415 = vmatpush1.msra.mxu0 0.0
      %416 = vmatprep.subr.mxu0 0.0
      %417 = vmatpush1.msra.mxu0 0.0
      %418 = vmatprep.subr.mxu0 0.0
      %419 = vmatpush1.msra.mxu0 0.0
      %420 = vmatprep.subr.mxu0 0.0
      %421 = vmatpush1.msra.mxu0 0.0
      %422 = vmatprep.subr.mxu0 0.0
      %423 = vmatpush1.msra.mxu0 0.0
      %424 = vmatprep.subr.mxu0 0.0
      %425 = vmatpush1.msra.mxu0 0.0
      %426 = vmatprep.subr.mxu0 0.0
      %427 = vmatpush1.msra.mxu0 0.0
      %428 = vmatprep.subr.mxu0 0.0
      %429 = vmatpush1.msra.mxu0 0.0
      %430 = vmatprep.subr.mxu0 0.0
      %431 = vmatpush1.msra.mxu0 0.0
      %432 = vmatprep.subr.mxu0 0.0
      %433 = vmatpush1.msra.mxu0 0.0
      %434 = vmatprep.subr.mxu0 0.0
      %435 = vmatpush1.msra.mxu0 0.0
      %436 = vmatprep.subr.mxu0 0.0
      %437 = vmatpush1.msra.mxu0 0.0
      %438 = vmatprep.subr.mxu0 0.0
      %439 = vmatpush1.msra.mxu0 0.0
      %440 = vmatprep.subr.mxu0 0.0
      %441 = vmatpush1.msra.mxu0 0.0
      %442 = vmatprep.subr.mxu0 0.0
      %443 = vmatpush1.msra.mxu0 0.0
      %444 = vmatprep.subr.mxu0 0.0
      %445 = vmatpush1.msra.mxu0 0.0
      %446 = vmatprep.subr.mxu0 0.0
      %447 = vmatpush1.msra.mxu0 0.0
      %448 = vmatprep.subr.mxu0 0.0
      %449 = vmatpush1.msra.mxu0 0.0
      %450 = vmatprep.subr.mxu0 0.0
      %451 = vmatpush1.msra.mxu0 0.0
      %452 = vmatprep.mubr.f32.mxu0 0.0
      %453 = vmatmul.mubr.f32.gmra.mrb[0].mxu0 %v341
      %v454 = vpop.f32.mrb[0].mxu0
      %v455 = vadd.f32 0.0, %v454
      %v456 = vpop.f32.mrb[0].mxu0
      %457 = vmatprep.mubr.f32.mxu0 0.0
      %458 = vmatmul.mubr.f32.gmra.mrb[0].mxu0 %v344
      %v459 = vpop.f32.mrb[0].mxu0
      %v460 = vadd.f32 0.0, %v459
      %v461 = vpop.f32.mrb[0].mxu0
      %462 = vmatprep.mubr.f32.mxu0 0.0
      %463 = vmatmul.mubr.f32.gmra.mrb[0].mxu0 %v347
      %v464 = vpop.f32.mrb[0].mxu0
      %v465 = vadd.f32 0.0, %v464
      %v466 = vpop.f32.mrb[0].mxu0
      %467 = vmatprep.mubr.f32.mxu0 0.0
      %468 = vmatmul.mubr.f32.gmra.mrb[0].mxu0 %v350
      %v469 = vpop.f32.mrb[0].mxu0
      %v470 = vadd.f32 0.0, %v469
      %v471 = vpop.f32.mrb[0].mxu0
      %472 = vmatprep.mubr.f32.mxu0 0.0
      %473 = vmatmul.mubr.f32.gmra.mrb[0].mxu0 %v353
      %v474 = vpop.f32.mrb[0].mxu0
      %v475 = vadd.f32 0.0, %v474
      %v476 = vpop.f32.mrb[0].mxu0
      %477 = vmatprep.mubr.f32.mxu0 0.0
      %478 = vmatmul.mubr.f32.gmra.mrb[0].mxu0 %v356
      %v479 = vpop.f32.mrb[0].mxu0
      %v480 = vadd.f32 0.0, %v479
      %v481 = vpop.f32.mrb[0].mxu0
      %482 = vmatprep.mubr.f32.mxu0 0.0
      %483 = vmatmul.mubr.f32.gmra.mrb[0].mxu0 %v359
      %v484 = vpop.f32.mrb[0].mxu0
      %v485 = vadd.f32 0.0, %v484
      %v486 = vpop.f32.mrb[0].mxu0
      %487 = vmatprep.mubr.f32.mxu0 0.0
      %488 = vmatmul.mubr.f32.gmra.mrb[0].mxu0 %v362
      %v489 = vpop.f32.mrb[0].mxu0
      %v490 = vadd.f32 0.0, %v489
      %v491 = vpop.f32.mrb[0].mxu0
      %492 = vmatprep.mubr.f32.mxu0 0.0
      %493 = vmatmul.mubr.f32.gmra.mrb[0].mxu0 %v365
      %v494 = vpop.f32.mrb[0].mxu0
      %v495 = vadd.f32 0.0, %v494
      %v496 = vpop.f32.mrb[0].mxu0
      %497 = vmatprep.mubr.f32.mxu0 0.0
      %498 = vmatmul.mubr.f32.gmra.mrb[0].mxu0 %v368
      %v499 = vpop.f32.mrb[0].mxu0
      %v500 = vadd.f32 0.0, %v499
      %v501 = vpop.f32.mrb[0].mxu0
      %502 = vmatprep.mubr.f32.mxu0 0.0
      %503 = vmatmul.mubr.f32.gmra.mrb[0].mxu0 %v371
      %v504 = vpop.f32.mrb[0].mxu0
      %v505 = vadd.f32 0.0, %v504
      %v506 = vpop.f32.mrb[0].mxu0
      %507 = vmatprep.mubr.f32.mxu0 0.0
      %508 = vmatmul.mubr.f32.gmra.mrb[0].mxu0 %v374
      %v509 = vpop.f32.mrb[0].mxu0
      %v510 = vadd.f32 0.0, %v509
      %v511 = vpop.f32.mrb[0].mxu0
      %512 = vmatprep.mubr.f32.mxu0 0.0
      %513 = vmatmul.mubr.f32.gmra.mrb[0].mxu0 %v377
      %v514 = vpop.f32.mrb[0].mxu0
      %v515 = vadd.f32 0.0, %v514
      %v516 = vpop.f32.mrb[0].mxu0
      %517 = vmatprep.mubr.f32.mxu0 0.0
      %518 = vmatmul.mubr.f32.gmra.mrb[0].mxu0 %v380
      %v519 = vpop.f32.mrb[0].mxu0
      %v520 = vadd.f32 0.0, %v519
      %v521 = vpop.f32.mrb[0].mxu0
      %522 = vmatprep.mubr.f32.mxu0 0.0
      %523 = vmatmul.mubr.f32.gmra.mrb[0].mxu0 %v383
      %v524 = vpop.f32.mrb[0].mxu0
      %v525 = vadd.f32 0.0, %v524
      %v526 = vpop.f32.mrb[0].mxu0
      %527 = vmatprep.mubr.f32.mxu0 0.0
      %528 = vmatmul.mubr.f32.gmra.mrb[0].mxu0 %v386
      %v529 = vpop.f32.mrb[0].mxu0
      %v530 = vadd.f32 0.0, %v529
      %v531 = vpop.f32.mrb[0].mxu0
      %532 = vdwg.mxu0
      %vm533 = vcmask 130048
      %v535 = vsel %vm533, %v307, 0
      %v538 = vsel %vm533, %v308, 0
      %v541 = vsel %vm533, %v309, 0
      %v544 = vsel %vm533, %v310, 0
      %v547 = vsel %vm533, %v311, 0
      %v550 = vsel %vm533, %v312, 0
      %v553 = vsel %vm533, %v313, 0
      %v556 = vsel %vm533, %v314, 0
      %v559 = vsel %vm533, %v315, 0
      %v562 = vsel %vm533, %v316, 0
      %v565 = vsel %vm533, %v317, 0
      %v568 = vsel %vm533, %v318, 0
      %v571 = vsel %vm533, %v319, 0
      %v574 = vsel %vm533, %v320, 0
      %v577 = vsel %vm533, %v321, 0
      %v580 = vsel %vm533, %v322, 0
      %582 = vmatprep.subr.mxu0 0.0
      %583 = vmatpush1.msra.mxu0 %v301
      %584 = vmatprep.subr.mxu0 0.0
      %585 = vmatpush1.msra.mxu0 %v302
      %586 = vmatprep.subr.mxu0 0.0
      %587 = vmatpush1.msra.mxu0 0.0
      %588 = vmatprep.subr.mxu0 0.0
      %589 = vmatpush1.msra.mxu0 0.0
      %590 = vmatprep.subr.mxu0 0.0
      %591 = vmatpush1.msra.mxu0 0.0
      %592 = vmatprep.subr.mxu0 0.0
      %593 = vmatpush1.msra.mxu0 0.0
      %594 = vmatprep.subr.mxu0 0.0
      %595 = vmatpush1.msra.mxu0 0.0
      %596 = vmatprep.subr.mxu0 0.0
      %597 = vmatpush1.msra.mxu0 0.0
      %598 = vmatprep.subr.mxu0 0.0
      %599 = vmatpush1.msra.mxu0 0.0
      %600 = vmatprep.subr.mxu0 0.0
      %601 = vmatpush1.msra.mxu0 0.0
      %602 = vmatprep.subr.mxu0 0.0
      %603 = vmatpush1.msra.mxu0 0.0
      %604 = vmatprep.subr.mxu0 0.0
      %605 = vmatpush1.msra.mxu0 0.0
      %606 = vmatprep.subr.mxu0 0.0
      %607 = vmatpush1.msra.mxu0 0.0
      %608 = vmatprep.subr.mxu0 0.0
      %609 = vmatpush1.msra.mxu0 0.0
      %610 = vmatprep.subr.mxu0 0.0
      %611 = vmatpush1.msra.mxu0 0.0
      %612 = vmatprep.subr.mxu0 0.0
      %613 = vmatpush1.msra.mxu0 0.0
      %614 = vmatprep.subr.mxu0 0.0
      %615 = vmatpush1.msra.mxu0 0.0
      %616 = vmatprep.subr.mxu0 0.0
      %617 = vmatpush1.msra.mxu0 0.0
      %618 = vmatprep.subr.mxu0 0.0
      %619 = vmatpush1.msra.mxu0 0.0
      %620 = vmatprep.subr.mxu0 0.0
      %621 = vmatpush1.msra.mxu0 0.0
      %622 = vmatprep.subr.mxu0 0.0
      %623 = vmatpush1.msra.mxu0 0.0
      %624 = vmatprep.subr.mxu0 0.0
      %625 = vmatpush1.msra.mxu0 0.0
      %626 = vmatprep.subr.mxu0 0.0
      %627 = vmatpush1.msra.mxu0 0.0
      %628 = vmatprep.subr.mxu0 0.0
      %629 = vmatpush1.msra.mxu0 0.0
      %630 = vmatprep.subr.mxu0 0.0
      %631 = vmatpush1.msra.mxu0 0.0
      %632 = vmatprep.subr.mxu0 0.0
      %633 = vmatpush1.msra.mxu0 0.0
      %634 = vmatprep.subr.mxu0 0.0
      %635 = vmatpush1.msra.mxu0 0.0
      %636 = vmatprep.subr.mxu0 0.0
      %637 = vmatpush1.msra.mxu0 0.0
      %638 = vmatprep.subr.mxu0 0.0
      %639 = vmatpush1.msra.mxu0 0.0
      %640 = vmatprep.subr.mxu0 0.0
      %641 = vmatpush1.msra.mxu0 0.0
      %642 = vmatprep.subr.mxu0 0.0
      %643 = vmatpush1.msra.mxu0 0.0
      %644 = vmatprep.subr.mxu0 0.0
      %645 = vmatpush1.msra.mxu0 0.0
      %646 = vmatprep.mubr.f32.mxu0 0.0
      %647 = vmatmul.mubr.f32.gmra.mrb[0].mxu0 %v535
      %v648 = vpop.f32.mrb[0].mxu0
      %v649 = vadd.f32 %v455, %v648
      %v650 = vpop.f32.mrb[0].mxu0
      %651 = vmatprep.mubr.f32.mxu0 0.0
      %652 = vmatmul.mubr.f32.gmra.mrb[0].mxu0 %v538
      %v653 = vpop.f32.mrb[0].mxu0
      %v654 = vadd.f32 %v460, %v653
      %v655 = vpop.f32.mrb[0].mxu0
      %656 = vmatprep.mubr.f32.mxu0 0.0
      %657 = vmatmul.mubr.f32.gmra.mrb[0].mxu0 %v541
      %v658 = vpop.f32.mrb[0].mxu0
      %v659 = vadd.f32 %v465, %v658
      %v660 = vpop.f32.mrb[0].mxu0
      %661 = vmatprep.mubr.f32.mxu0 0.0
      %662 = vmatmul.mubr.f32.gmra.mrb[0].mxu0 %v544
      %v663 = vpop.f32.mrb[0].mxu0
      %v664 = vadd.f32 %v470, %v663
      %v665 = vpop.f32.mrb[0].mxu0
      %666 = vmatprep.mubr.f32.mxu0 0.0
      %667 = vmatmul.mubr.f32.gmra.mrb[0].mxu0 %v547
      %v668 = vpop.f32.mrb[0].mxu0
      %v669 = vadd.f32 %v475, %v668
      %v670 = vpop.f32.mrb[0].mxu0
      %671 = vmatprep.mubr.f32.mxu0 0.0
      %672 = vmatmul.mubr.f32.gmra.mrb[0].mxu0 %v550
      %v673 = vpop.f32.mrb[0].mxu0
      %v674 = vadd.f32 %v480, %v673
      %v675 = vpop.f32.mrb[0].mxu0
      %676 = vmatprep.mubr.f32.mxu0 0.0
      %677 = vmatmul.mubr.f32.gmra.mrb[0].mxu0 %v553
      %v678 = vpop.f32.mrb[0].mxu0
      %v679 = vadd.f32 %v485, %v678
      %v680 = vpop.f32.mrb[0].mxu0
      %681 = vmatprep.mubr.f32.mxu0 0.0
      %682 = vmatmul.mubr.f32.gmra.mrb[0].mxu0 %v556
      %v683 = vpop.f32.mrb[0].mxu0
      %v684 = vadd.f32 %v490, %v683
      %v685 = vpop.f32.mrb[0].mxu0
      %686 = vmatprep.mubr.f32.mxu0 0.0
      %687 = vmatmul.mubr.f32.gmra.mrb[0].mxu0 %v559
      %v688 = vpop.f32.mrb[0].mxu0
      %v689 = vadd.f32 %v495, %v688
      %v690 = vpop.f32.mrb[0].mxu0
      %691 = vmatprep.mubr.f32.mxu0 0.0
      %692 = vmatmul.mubr.f32.gmra.mrb[0].mxu0 %v562
      %v693 = vpop.f32.mrb[0].mxu0
      %v694 = vadd.f32 %v500, %v693
      %v695 = vpop.f32.mrb[0].mxu0
      %696 = vmatprep.mubr.f32.mxu0 0.0
      %697 = vmatmul.mubr.f32.gmra.mrb[0].mxu0 %v565
      %v698 = vpop.f32.mrb[0].mxu0
      %v699 = vadd.f32 %v505, %v698
      %v700 = vpop.f32.mrb[0].mxu0
      %701 = vmatprep.mubr.f32.mxu0 0.0
      %702 = vmatmul.mubr.f32.gmra.mrb[0].mxu0 %v568
      %v703 = vpop.f32.mrb[0].mxu0
      %v704 = vadd.f32 %v510, %v703
      %v705 = vpop.f32.mrb[0].mxu0
      %706 = vmatprep.mubr.f32.mxu0 0.0
      %707 = vmatmul.mubr.f32.gmra.mrb[0].mxu0 %v571
      %v708 = vpop.f32.mrb[0].mxu0
      %v709 = vadd.f32 %v515, %v708
      %v710 = vpop.f32.mrb[0].mxu0
      %711 = vmatprep.mubr.f32.mxu0 0.0
      %712 = vmatmul.mubr.f32.gmra.mrb[0].mxu0 %v574
      %v713 = vpop.f32.mrb[0].mxu0
      %v714 = vadd.f32 %v520, %v713
      %v715 = vpop.f32.mrb[0].mxu0
      %716 = vmatprep.mubr.f32.mxu0 0.0
      %717 = vmatmul.mubr.f32.gmra.mrb[0].mxu0 %v577
      %v718 = vpop.f32.mrb[0].mxu0
      %v719 = vadd.f32 %v525, %v718
      %v720 = vpop.f32.mrb[0].mxu0
      %721 = vmatprep.mubr.f32.mxu0 0.0
      %722 = vmatmul.mubr.f32.gmra.mrb[0].mxu0 %v580
      %v723 = vpop.f32.mrb[0].mxu0
      %v724 = vadd.f32 %v530, %v723
      %v725 = vpop.f32.mrb[0].mxu0
      %726 = vdwg.mxu0
      %v727 = vld [vmem:[%s4] sm:$0x1]
      %v729 = vlaneseq
      %v730 = vshrl.u32 %v729, 7
      %v731 = vsub.s32 0, %v730
      %v732 = vrot.slane %v727, %v731
      %v734 = vadd.f32 %v649, %v732
      %v735 = vadd.f32 %v654, %v732
      %v736 = vadd.f32 %v659, %v732
      %v737 = vadd.f32 %v664, %v732
      %v738 = vadd.f32 %v669, %v732
      %v739 = vadd.f32 %v674, %v732
      %v740 = vadd.f32 %v679, %v732
      %v741 = vadd.f32 %v684, %v732
      %v742 = vadd.f32 %v689, %v732
      %v743 = vadd.f32 %v694, %v732
      %v744 = vadd.f32 %v699, %v732
      %v745 = vadd.f32 %v704, %v732
      %v746 = vadd.f32 %v709, %v732
      %v747 = vadd.f32 %v714, %v732
      %v748 = vadd.f32 %v719, %v732
      %v749 = vadd.f32 %v724, %v732
      %v750 = vmax.f32 %v734, 0.0
      %v751 = vmax.f32 %v735, 0.0
      %v752 = vmax.f32 %v736, 0.0
      %v753 = vmax.f32 %v737, 0.0
      %v754 = vmax.f32 %v738, 0.0
      %v755 = vmax.f32 %v739, 0.0
      %v756 = vmax.f32 %v740, 0.0
      %v757 = vmax.f32 %v741, 0.0
      %v758 = vmax.f32 %v742, 0.0
      %v759 = vmax.f32 %v743, 0.0
      %v760 = vmax.f32 %v744, 0.0
      %v761 = vmax.f32 %v745, 0.0
      %v762 = vmax.f32 %v746, 0.0
      %v763 = vmax.f32 %v747, 0.0
      %v764 = vmax.f32 %v748, 0.0
      %v765 = vmax.f32 %v749, 0.0
      %v766 = vld [vmem:[%s6] sm:$0xf]
      %768 = vset.pattern.permute.xlu0 0
      %769 = vperm.xlu0 %768, %v766
      %v770 = vpop.permute.xlu0 %769
      %772 = vmatprep.subr.mxu0 0.0
      %773 = vmatpush1.xpose.msra.mxu0 %v750
      %774 = vmatprep.subr.mxu0 0.0
      %775 = vmatpush1.xpose.msra.mxu0 %v751
      %776 = vmatprep.subr.mxu0 0.0
      %777 = vmatpush1.xpose.msra.mxu0 %v752
      %778 = vmatprep.subr.mxu0 0.0
      %779 = vmatpush1.xpose.msra.mxu0 %v753
      %780 = vmatprep.subr.mxu0 0.0
      %781 = vmatpush1.xpose.msra.mxu0 %v754
      %782 = vmatprep.subr.mxu0 0.0
      %783 = vmatpush1.xpose.msra.mxu0 %v755
      %784 = vmatprep.subr.mxu0 0.0
      %785 = vmatpush1.xpose.msra.mxu0 %v756
      %786 = vmatprep.subr.mxu0 0.0
      %787 = vmatpush1.xpose.msra.mxu0 %v757
      %788 = vmatprep.subr.mxu0 0.0
      %789 = vmatpush1.xpose.msra.mxu0 %v758
      %790 = vmatprep.subr.mxu0 0.0
      %791 = vmatpush1.xpose.msra.mxu0 %v759
      %792 = vmatprep.subr.mxu0 0.0
      %793 = vmatpush1.xpose.msra.mxu0 %v760
      %794 = vmatprep.subr.mxu0 0.0
      %795 = vmatpush1.xpose.msra.mxu0 %v761
      %796 = vmatprep.subr.mxu0 0.0
      %797 = vmatpush1.xpose.msra.mxu0 %v762
      %798 = vmatprep.subr.mxu0 0.0
      %799 = vmatpush1.xpose.msra.mxu0 %v763
      %800 = vmatprep.subr.mxu0 0.0
      %801 = vmatpush1.xpose.msra.mxu0 %v764
      %802 = vmatprep.subr.mxu0 0.0
      %803 = vmatpush1.xpose.msra.mxu0 %v765
      %804 = vmatprep.subr.mxu0 0.0
      %805 = vmatpush1.xpose.msra.mxu0 0.0
      %806 = vmatprep.subr.mxu0 0.0
      %807 = vmatpush1.xpose.msra.mxu0 0.0
      %808 = vmatprep.subr.mxu0 0.0
      %809 = vmatpush1.xpose.msra.mxu0 0.0
      %810 = vmatprep.subr.mxu0 0.0
      %811 = vmatpush1.xpose.msra.mxu0 0.0
      %812 = vmatprep.subr.mxu0 0.0
      %813 = vmatpush1.xpose.msra.mxu0 0.0
      %814 = vmatprep.subr.mxu0 0.0
      %815 = vmatpush1.xpose.msra.mxu0 0.0
      %816 = vmatprep.subr.mxu0 0.0
      %817 = vmatpush1.xpose.msra.mxu0 0.0
      %818 = vmatprep.subr.mxu0 0.0
      %819 = vmatpush1.xpose.msra.mxu0 0.0
      %820 = vmatprep.subr.mxu0 0.0
      %821 = vmatpush1.xpose.msra.mxu0 0.0
      %822 = vmatprep.subr.mxu0 0.0
      %823 = vmatpush1.xpose.msra.mxu0 0.0
      %824 = vmatprep.subr.mxu0 0.0
      %825 = vmatpush1.xpose.msra.mxu0 0.0
      %826 = vmatprep.subr.mxu0 0.0
      %827 = vmatpush1.xpose.msra.mxu0 0.0
      %828 = vmatprep.subr.mxu0 0.0
      %829 = vmatpush1.xpose.msra.mxu0 0.0
      %830 = vmatprep.subr.mxu0 0.0
      %831 = vmatpush1.xpose.msra.mxu0 0.0
      %832 = vmatprep.subr.mxu0 0.0
      %833 = vmatpush1.xpose.msra.mxu0 0.0
      %834 = vmatprep.subr.mxu0 0.0
      %835 = vmatpush1.xpose.msra.mxu0 0.0
      %836 = vmatprep.mubr.f32.mxu0 0.0
      %837 = vmatmul.mubr.f32.gmra.mrb[0].mxu0 %v306
      %v838 = vpop.f32.mrb[0].mxu0
      %v839 = vadd.f32 %v770, %v838
      %v840 = vpop.f32.mrb[0].mxu0
      %841 = vdwg.mxu0
      %842 = vst [vmem:[%s300] sm:$0xf] %v839
      %p843 = scmp.lt.s32.totalorder %s18, 2
      %s844 = scalar_select %p843, %s18, 2
      %s845 = smul.addr %s844, 4
      %s846 = scalar_lea.vmem %s7, %s845
      // Predicated region
      $region49: #{multihead2singleout.1} parent=47 // pred_check
        %p847 = pneg %p193
      $region50: #{multihead2singleout.1} parent=47 // pred_check_branch
        %849 = sbr.rel (%p847) target = $region52
      $region51: #{multihead2singleout.1} parent=47 // pred_region
        _
      $region52: #{multihead2singleout.1} parent=47 // pred_fallthru
        _
    $region48: #{multihead2singleout.1} parent=5 // pred_fallthru
      _
    %p850 = scmp.le.s32.totalorder 2, %s13
    // Predicated region
    $region53: #{multihead2singleout.1} parent=5 // pred_check
      %p851 = pneg %p850
    $region54: #{multihead2singleout.1} parent=5 // pred_check_branch
      %853 = sbr.rel (%p851) target = $region56
    $region55: #{multihead2singleout.1} parent=5 // pred_region
      %s854 = ssub.s32 %s13, 2
      // Predicated region
      $region57: #{multihead2singleout.1} parent=55 // pred_check
        %p855 = pneg %p199
      $region58: #{multihead2singleout.1} parent=55 // pred_check_branch
        %857 = sbr.rel (%p855) target = $region60
      $region59: #{multihead2singleout.1} parent=55 // pred_region
        %p858 = scmp.lt.s32.totalorder %s19, 2
        %s859 = scalar_select %p858, %s19, 2
        %s860 = smul.addr %s859, 4
        %s861 = scalar_lea.vmem %s7, %s860
      $region60: #{multihead2singleout.1} parent=55 // pred_fallthru
        _
    $region56: #{multihead2singleout.1} parent=5 // pred_fallthru
      _
  $region6: #{multihead2singleout.1} parent=0 // loop_footer
    %s17 = sadd.s32 1, %s13
  $region7: #{multihead2singleout.1} parent=0 // loop_footer_branch
    %12 = sbr.rel target = $region3
  $region8: #{multihead2singleout.1} parent=0 // loop_exit
    _

</llo_original>
